<compile_context>
chip_gen: v6e
topology: v6e:2x2x1
jax: 0.10.0
libtpu: 0.0.40
codegen_flags: <defaults>
</compile_context>

<pallas_src>
import functools

import jax
import jax.numpy as jnp
from jax.experimental import pallas as pl
from jax.experimental.pallas import tpu as pltpu


def _round_up(x, m):
    return ((x + m - 1) // m) * m


def _vmem_cap_bytes():
    """~75% of this generation's physical VMEM (fallback safe for v7x's 64 MiB)."""
    try:
        cap = int(pltpu.get_tpu_info().vmem_capacity_bytes)
    except Exception:
        cap = 64 * 1024 * 1024
    return (cap * 3) // 4


def _pipeline_vmem_bytes(tile_m, e, wp, itemsize=4):
    # Pallas double-buffers every BlockSpec stream by default.
    return itemsize * (2 * tile_m * e + 2 * e * wp + 2 * wp + 2 * tile_m * wp)


# ----------------------------- Pallas kernel --------------------------------
def _bridge_matmul_kernel(x_ref, w_ref, b_ref, o_ref):
    # x_ref: (tile_m, E)   w_ref: (E, Wp)   b_ref: (1, Wp)   o_ref: (tile_m, Wp)
    acc = jnp.dot(x_ref[...], w_ref[...], preferred_element_type=jnp.float32)
    o_ref[...] = (acc + b_ref[...]).astype(o_ref.dtype)


def fused_bridge_matmul(x, w, b, tile_m):
    """out = x @ w + b with an M-tiled, weight-resident pipeline."""
    m_pad, e = x.shape
    wp = w.shape[-1]
    n_m = m_pad // tile_m

    flops = 2 * m_pad * e * wp
    bytes_accessed = x.dtype.itemsize * (m_pad * e + e * wp + wp + m_pad * wp)

    return pl.pallas_call(
        _bridge_matmul_kernel,
        out_shape=jax.ShapeDtypeStruct((m_pad, wp), x.dtype),
        grid_spec=pltpu.PrefetchScalarGridSpec(
            num_scalar_prefetch=0,
            grid=(n_m,),
            in_specs=[
                # activation rows: new block each m tile
                pl.BlockSpec((tile_m, e), lambda m: (m, 0)),
                # fused weight slab: constant block index -> VMEM-resident
                pl.BlockSpec((e, wp), lambda m: (0, 0)),
                # fused bias slab: constant block index
                pl.BlockSpec((1, wp), lambda m: (0, 0)),
            ],
            out_specs=pl.BlockSpec((tile_m, wp), lambda m: (m, 0)),
        ),
        compiler_params=pltpu.CompilerParams(
            dimension_semantics=("parallel",),
            vmem_limit_bytes=_vmem_cap_bytes(),
        ),
        cost_estimate=pl.CostEstimate(
            flops=flops, transcendentals=0, bytes_accessed=bytes_accessed
        ),
    )(x, w, b)


# ------------------------------ Bridge module -------------------------------
def init_bridge_params(key, hidden_size, bidirectional):
    enc_out = hidden_size * (2 if bidirectional else 1)
    keys = jax.random.split(key, 6)
    scale = 1.0 / jnp.sqrt(enc_out)

    def lin(kw, kb):
        w = jax.random.uniform(kw, (enc_out, hidden_size), jnp.float32, -scale, scale)
        b = jax.random.uniform(kb, (hidden_size,), jnp.float32, -scale, scale)
        return w, b

    return {
        "hidden": lin(keys[0], keys[1]),
        "cell": lin(keys[2], keys[3]),
        "enc_out": lin(keys[4], keys[5]),
    }


def bridge_forward(params, encoder_output, final_encoder_states, bidirectional,
                   tile_m_target=512):
    final_encoder_hidden, final_encoder_cell = final_encoder_states

    # Stack h/c once so the bidirectional reshuffle is a single (tiny) concat.
    hc = jnp.stack([final_encoder_hidden, final_encoder_cell])  # (2, L*ndir, B, H)
    if bidirectional:
        # torch.cat(h.chunk(2, dim=0), dim=2): (2L, B, H) -> (L, B, 2H)
        L = final_encoder_hidden.shape[0] // 2
        hc = jnp.concatenate([hc[:, :L], hc[:, L:]], axis=3)     # (2, L, B, 2H)
    else:
        L = final_encoder_hidden.shape[0]

    _, _, Bh, E = hc.shape
    B, S, E2 = encoder_output.shape
    assert E2 == E, "encoder_output feature size must match hidden state feature size"

    wh, bh = params["hidden"]
    wc, bc = params["cell"]
    wo, bo = params["enc_out"]
    H = wh.shape[1]

    Mh = L * Bh          # rows of hidden (and of cell) projection input
    Me = B * S           # rows of encoder_output projection input
    M_total = 2 * Mh + Me

    # ---- tile_m / M_pad (near-minimal padding, tile_m forced to mult of 8) ----
    tile_m_target = max(8, _round_up(int(tile_m_target), 8))
    M_pad8 = _round_up(M_total, 8)
    n_tiles = pl.cdiv(M_pad8, tile_m_target)
    tile_m = _round_up(pl.cdiv(M_pad8, n_tiles), 8)

    Wcat = 3 * H
    Wp = _round_up(Wcat, 128)

    # Shrink tile_m if the double-buffered pipeline would not fit the VMEM budget.
    cap = _vmem_cap_bytes()
    while tile_m > 8 and _pipeline_vmem_bytes(tile_m, E, Wp) > cap:
        tile_m = max(8, _round_up(tile_m // 2, 8))
    n_tiles = pl.cdiv(M_pad8, tile_m)
    M_pad = n_tiles * tile_m

    # ---- single row slab: [hidden rows | cell rows | enc rows | zero tail] ----
    dtype = encoder_output.dtype
    parts = [hc[0].reshape(Mh, E), hc[1].reshape(Mh, E),
             encoder_output.reshape(Me, E)]
    if M_pad != M_total:
        parts.append(jnp.zeros((M_pad - M_total, E), dtype))
    x = jnp.concatenate(parts, axis=0)                           # (M_pad, E)

    # ---- fused (E, 3H) weight / bias slab, padded to a lane multiple ----
    w = jnp.concatenate([wh, wc, wo], axis=1)                    # (E, 3H)
    b = jnp.concatenate([bh, bc, bo])                            # (3H,)
    if Wp != Wcat:
        w = jnp.pad(w, ((0, 0), (0, Wp - Wcat)))
        b = jnp.pad(b, ((0, Wp - Wcat),))
    b = b.reshape(1, Wp)

    out = fused_bridge_matmul(x, w.astype(dtype), b.astype(dtype), tile_m)

    # Each row group only consumes its own projection's output columns.
    init_decoder_hidden = out[0:Mh, 0:H].reshape(L, Bh, H)
    init_decoder_cell = out[Mh:2 * Mh, H:2 * H].reshape(L, Bh, H)
    encoder_memory = out[2 * Mh:2 * Mh + Me, 2 * H:3 * H].reshape(B, S, H)

    return encoder_memory, (init_decoder_hidden, init_decoder_cell)


# --------------------------------- main --------------------------------------
if __name__ == "__main__":
    hidden_size = 32
    bidirectional = True
    num_layers = 2
    batch = 2
    seq = 8
    enc_out_size = hidden_size * (2 if bidirectional else 1)

    key = jax.random.PRNGKey(0)
    kp, k1, k2, k3 = jax.random.split(key, 4)

    params = init_bridge_params(kp, hidden_size, bidirectional)

    encoder_output = jax.random.normal(k1, (batch, seq, enc_out_size), jnp.float32)
    final_encoder_hidden = jax.random.normal(
        k2, (num_layers * 2, batch, hidden_size), jnp.float32
    )
    final_encoder_cell = jax.random.normal(
        k3, (num_layers * 2, batch, hidden_size), jnp.float32
    )

    fwd = jax.jit(functools.partial(bridge_forward, bidirectional=bidirectional))
    encoder_memory, (dec_h, dec_c) = fwd(
        params, encoder_output, (final_encoder_hidden, final_encoder_cell)
    )
    jax.block_until_ready((encoder_memory, dec_h, dec_c))

    # Lightweight correctness check against pure-JAX reference.
    wh, bh = params["hidden"]
    wc, bc = params["cell"]
    wo, bo = params["enc_out"]
    h_cat = jnp.concatenate(
        [final_encoder_hidden[:num_layers], final_encoder_hidden[num_layers:]], axis=2
    )
    c_cat = jnp.concatenate(
        [final_encoder_cell[:num_layers], final_encoder_cell[num_layers:]], axis=2
    )
    ref_mem = encoder_output @ wo + bo
    ref_h = h_cat @ wh + bh
    ref_c = c_cat @ wc + bc
    assert encoder_memory.shape == ref_mem.shape
    assert dec_h.shape == ref_h.shape and dec_c.shape == ref_c.shape
    assert jnp.allclose(encoder_memory, ref_mem, atol=2e-5)
    assert jnp.allclose(dec_h, ref_h, atol=2e-5)
    assert jnp.allclose(dec_c, ref_c, atol=2e-5)

    print("KERNEL_OK")
</pallas_src>

<mosaic_0001>
module attributes {stable_mosaic.version = 11 : i64} {
  func.func @_bridge_matmul_kernel(%arg0: i32, %arg1: memref<24x64xf32, #tpu.memory_space<vmem>>, %arg2: memref<64x128xf32, #tpu.memory_space<vmem>>, %arg3: memref<1x128xf32, #tpu.memory_space<vmem>>, %arg4: memref<24x128xf32, #tpu.memory_space<vmem>>) attributes {dimension_semantics = [#tpu.dimension_semantics<parallel>], iteration_bounds = array<i64: 1>, scalar_prefetch = 0 : i64, scratch_operands = 0 : i64, tpu.core_type = #tpu.core_type<tc>, window_params = [{transform_indices = @transform_0, window_bounds = array<i64: 24, 64>}, {pipeline_mode = #tpu.pipeline_mode<synchronous>, transform_indices = @transform_1, window_bounds = array<i64: 64, 128>}, {pipeline_mode = #tpu.pipeline_mode<synchronous>, transform_indices = @transform_2, window_bounds = array<i64: 1, 128>}, {transform_indices = @transform_3, window_bounds = array<i64: 24, 128>}]} {
    %c0 = arith.constant 0 : index
    %c0_0 = arith.constant 0 : index
    %0 = vector.load %arg1[%c0, %c0_0] : memref<24x64xf32, #tpu.memory_space<vmem>>, vector<24x64xf32>
    %c0_1 = arith.constant 0 : index
    %c0_2 = arith.constant 0 : index
    %1 = vector.load %arg2[%c0_1, %c0_2] : memref<64x128xf32, #tpu.memory_space<vmem>>, vector<64x128xf32>
    %cst = arith.constant dense<0.000000e+00> : vector<24x128xf32>
    %2 = tpu.matmul %0, %1, %cst {dimension_numbers = #tpu.dot_dimension_numbers<[1], [0], [0], [1], [0, 0, 1, 1], [], []>} : vector<24x64xf32>, vector<64x128xf32>, vector<24x128xf32> -> vector<24x128xf32>
    %c0_3 = arith.constant 0 : index
    %c0_4 = arith.constant 0 : index
    %3 = vector.load %arg3[%c0_3, %c0_4] : memref<1x128xf32, #tpu.memory_space<vmem>>, vector<1x128xf32>
    %4 = vector.broadcast %3 : vector<1x128xf32> to vector<24x128xf32>
    %5 = arith.addf %2, %4 : vector<24x128xf32>
    %c0_5 = arith.constant 0 : index
    %c0_6 = arith.constant 0 : index
    %6 = vector.load %arg4[%c0_5, %c0_6] : memref<24x128xf32, #tpu.memory_space<vmem>>, vector<24x128xf32>
    tpu.vector_store %arg4[%c0_5, %c0_6], %5 {strides = array<i32>} : memref<24x128xf32, #tpu.memory_space<vmem>>, vector<24x128xf32>,
    return
  }
  func.func @transform_0(%arg0: i32) -> (i32, i32) {
    %c0_i32 = arith.constant 0 : i32
    %c0_i32_0 = arith.constant 0 : i32
    return %arg0, %c0_i32 : i32, i32
  }
  func.func @transform_1(%arg0: i32) -> (i32, i32) {
    %c0_i32 = arith.constant 0 : i32
    %c0_i32_0 = arith.constant 0 : i32
    %c0_i32_1 = arith.constant 0 : i32
    return %c0_i32, %c0_i32_0 : i32, i32
  }
  func.func @transform_2(%arg0: i32) -> (i32, i32) {
    %c0_i32 = arith.constant 0 : i32
    %c0_i32_0 = arith.constant 0 : i32
    %c0_i32_1 = arith.constant 0 : i32
    return %c0_i32, %c0_i32_0 : i32, i32
  }
  func.func @transform_3(%arg0: i32) -> (i32, i32) {
    %c0_i32 = arith.constant 0 : i32
    %c0_i32_0 = arith.constant 0 : i32
    return %arg0, %c0_i32 : i32, i32
  }
}

</mosaic_0001>

<llo_original>
// kernel: bridge_forward.1
$region0: #{bridge_forward.1}
  #allocation0 [shape = 'u32[]', space=smem, size = 0x4, offset = 0x4, fixed_abs, tag = 'smem constant byte address 0x4 - core index']
  #allocation1 [shape = 'u32[144,128]{1,0:T(1,128)}', space=vmem, size = 0x12000, scoped, tag = 'internal scratch']
  %s0 = inlined_call_operand.vmem [shape: f32[24,64], index: 0, kind: input, shape index: {}]
  %s1 = inlined_call_operand.vmem [shape: f32[64,128], index: 1, kind: input, shape index: {}]
  %s2 = inlined_call_operand.vmem [shape: f32[1,128], index: 2, kind: input, shape index: {}]
  %s3 = inlined_call_operand.vmem [shape: f32[24,128], index: 3, kind: output, shape index: {}]
  %s4 = sld [smem:[#allocation0]]
  $region22: #{bridge_forward.1} parent=0
    _
  %s6 = ssub.s32 1, %s4
  %s7 = scalar_select 0, %s6, %s4
  // Predicated region
  $region2: #{bridge_forward.1} parent=0 // pred_check
    _
  $region3: #{bridge_forward.1} parent=0 // pred_check_branch
    %9 = sbr.rel (0) target = $region5
  $region4: #{bridge_forward.1} parent=0 // pred_region
    _
  $region5: #{bridge_forward.1} parent=0 // pred_fallthru
    _
  // Predicated region
  $region6: #{bridge_forward.1} parent=0 // pred_check
    _
  $region7: #{bridge_forward.1} parent=0 // pred_check_branch
    %11 = sbr.rel (0) target = $region9
  $region8: #{bridge_forward.1} parent=0 // pred_region
    _
  $region9: #{bridge_forward.1} parent=0 // pred_fallthru
    _
  // Predicated region
  $region10: #{bridge_forward.1} parent=0 // pred_check
    _
  $region11: #{bridge_forward.1} parent=0 // pred_check_branch
    %13 = sbr.rel (0) target = $region13
  $region12: #{bridge_forward.1} parent=0 // pred_region
    _
  $region13: #{bridge_forward.1} parent=0 // pred_fallthru
    _
  %v14 = vld [vmem:[%s0] sm:$0xff]
  %v15 = vld [vmem:[%s0 + $0x8] sm:$0xff]
  %v16 = vld [vmem:[%s0 + $0x10] sm:$0xff]
  %v17 = vld [vmem:[%s1] sm:$0xff]
  %v18 = vld [vmem:[%s1 + $0x8] sm:$0xff]
  %v19 = vld [vmem:[%s1 + $0x10] sm:$0xff]
  %v20 = vld [vmem:[%s1 + $0x18] sm:$0xff]
  %v21 = vld [vmem:[%s1 + $0x20] sm:$0xff]
  %v22 = vld [vmem:[%s1 + $0x28] sm:$0xff]
  %v23 = vld [vmem:[%s1 + $0x30] sm:$0xff]
  %v24 = vld [vmem:[%s1 + $0x38] sm:$0xff]
  %v25 = vld [vmem:[%s2] sm:$0x1]
  %v27 = vlaneseq
  %v28 = vshrl.u32 %v27, 7
  %v29 = vsub.s32 0, %v28
  %v30 = vrot.slane %v25, %v29
  %vm32 = vcmask 523264
  %v34 = vsel %vm32, %v14, 0
  %v37 = vsel %vm32, %v15, 0
  %v40 = vsel %vm32, %v16, 0
  %42 = vmatprep.subr.mxu0 0.0
  %43 = vmatpush1.msra.mxu0 0.0
  %44 = vmatprep.subr.mxu0 0.0
  %45 = vmatpush1.msra.mxu0 0.0
  %46 = vmatprep.subr.mxu0 0.0
  %47 = vmatpush1.msra.mxu0 0.0
  %48 = vmatprep.subr.mxu0 0.0
  %49 = vmatpush1.msra.mxu0 0.0
  %50 = vmatprep.subr.mxu0 0.0
  %51 = vmatpush1.msra.mxu0 0.0
  %52 = vmatprep.subr.mxu0 0.0
  %53 = vmatpush1.msra.mxu0 0.0
  %54 = vmatprep.subr.mxu0 0.0
  %55 = vmatpush1.msra.mxu0 0.0
  %56 = vmatprep.subr.mxu0 0.0
  %57 = vmatpush1.msra.mxu0 0.0
  %58 = vmatprep.subr.mxu0 0.0
  %59 = vmatpush1.msra.mxu0 %v24
  %60 = vmatprep.subr.mxu0 0.0
  %61 = vmatpush1.msra.mxu0 %v23
  %62 = vmatprep.subr.mxu0 0.0
  %63 = vmatpush1.msra.mxu0 %v22
  %64 = vmatprep.subr.mxu0 0.0
  %65 = vmatpush1.msra.mxu0 %v21
  %66 = vmatprep.subr.mxu0 0.0
  %67 = vmatpush1.msra.mxu0 %v20
  %68 = vmatprep.subr.mxu0 0.0
  %69 = vmatpush1.msra.mxu0 %v19
  %70 = vmatprep.subr.mxu0 0.0
  %71 = vmatpush1.msra.mxu0 %v18
  %72 = vmatprep.subr.mxu0 0.0
  %73 = vmatpush1.msra.mxu0 %v17
  %74 = vmatprep.subr.mxu0 0.0
  %75 = vmatpush2.msra.mxu0 0.0
  %76 = vmatprep.subr.mxu0 0.0
  %77 = vmatpush2.msra.mxu0 0.0
  %78 = vmatprep.subr.mxu0 0.0
  %79 = vmatpush2.msra.mxu0 0.0
  %80 = vmatprep.subr.mxu0 0.0
  %81 = vmatpush2.msra.mxu0 0.0
  %82 = vmatprep.subr.mxu0 0.0
  %83 = vmatpush2.msra.mxu0 0.0
  %84 = vmatprep.subr.mxu0 0.0
  %85 = vmatpush2.msra.mxu0 0.0
  %86 = vmatprep.subr.mxu0 0.0
  %87 = vmatpush2.msra.mxu0 0.0
  %88 = vmatprep.subr.mxu0 0.0
  %89 = vmatpush2.msra.mxu0 0.0
  %90 = vmatprep.subr.mxu0 0.0
  %91 = vmatpush2.msra.mxu0 0.0
  %92 = vmatprep.subr.mxu0 0.0
  %93 = vmatpush2.msra.mxu0 0.0
  %94 = vmatprep.subr.mxu0 0.0
  %95 = vmatpush2.msra.mxu0 0.0
  %96 = vmatprep.subr.mxu0 0.0
  %97 = vmatpush2.msra.mxu0 0.0
  %98 = vmatprep.subr.mxu0 0.0
  %99 = vmatpush2.msra.mxu0 0.0
  %100 = vmatprep.subr.mxu0 0.0
  %101 = vmatpush2.msra.mxu0 0.0
  %102 = vmatprep.subr.mxu0 0.0
  %103 = vmatpush2.msra.mxu0 0.0
  %104 = vmatprep.subr.mxu0 0.0
  %105 = vmatpush2.msra.mxu0 0.0
  %106 = vmatprep.mubr.f32.mxu0 0.0
  %107 = vmatmul.mubr.f32.gmra.mxu0 %v34
  %v108 = vpop.f32.mrf.mxu0
  %v109 = vadd.f32 %v30, %v108
  %v110 = vpop.f32.mrf.mxu0
  %111 = vmatprep.mubr.f32.mxu0 0.0
  %112 = vmatmul.mubr.f32.gmra.mxu0 %v37
  %v113 = vpop.f32.mrf.mxu0
  %v114 = vadd.f32 %v30, %v113
  %v115 = vpop.f32.mrf.mxu0
  %116 = vmatprep.mubr.f32.mxu0 0.0
  %117 = vmatmul.mubr.f32.gmra.mxu0 %v40
  %v118 = vpop.f32.mrf.mxu0
  %v119 = vadd.f32 %v30, %v118
  %v120 = vpop.f32.mrf.mxu0
  %121 = vdwg.mxu0
  %122 = vst [vmem:[%s3] sm:$0xff] %v109
  %123 = vst [vmem:[%s3 + $0x8] sm:$0xff] %v114
  %124 = vst [vmem:[%s3 + $0x10] sm:$0xff] %v119
  // Predicated region
  $region14: #{bridge_forward.1} parent=0 // pred_check
    _
  $region15: #{bridge_forward.1} parent=0 // pred_check_branch
    %126 = sbr.rel (0) target = $region17
  $region16: #{bridge_forward.1} parent=0 // pred_region
    _
  $region17: #{bridge_forward.1} parent=0 // pred_fallthru
    _
  // Predicated region
  $region18: #{bridge_forward.1} parent=0 // pred_check
    _
  $region19: #{bridge_forward.1} parent=0 // pred_check_branch
    %128 = sbr.rel (0) target = $region21
  $region20: #{bridge_forward.1} parent=0 // pred_region
    _
  $region21: #{bridge_forward.1} parent=0 // pred_fallthru
    _

</llo_original>
